<compile_context>
chip_gen: v6e
topology: v6e:2x2x1
jax: 0.10.0
libtpu: 0.0.40
codegen_flags: <defaults>
</compile_context>

<pallas_src>
import functools

import jax
import jax.numpy as jnp
from jax.experimental import pallas as pl
from jax.experimental.pallas import tpu as pltpu


def _round_up(n, m):
    return ((n + m - 1) // m) * m


def _gelu_exact(x):
    # PyTorch nn.functional.gelu default ("none" approximation) = exact erf GELU.
    return 0.5 * x * (1.0 + jax.lax.erf(x * (1.0 / jnp.sqrt(2.0))))


def feature_mixer_kernel(x_ref, ln_w_ref, ln_b_ref, w1_ref, b1_ref,
                         w2_ref, b2_ref, wg_ref, bg_ref, o_ref,
                         *, eps, d_valid, use_tanh_gelu):
    x = x_ref[...].astype(jnp.float32)                      # (tm, Dp)
    tm, dp = x.shape
    padded = d_valid < dp                                   # trace-time Python bool
    inv_d = 1.0 / float(d_valid)

    # --- LayerNorm, single reduction pass (biased variance, matches torch) ---
    # Padded feature columns of x are exactly zero, so both sums are exact.
    mean = jnp.sum(x, axis=-1, keepdims=True) * inv_d
    ex2 = jnp.sum(x * x, axis=-1, keepdims=True) * inv_d
    var = jnp.maximum(ex2 - mean * mean, 0.0)
    h = (x - mean) * jax.lax.rsqrt(var + eps) * ln_w_ref[...] + ln_b_ref[...]
    # ln_w / ln_b are zero in padded cols -> h padded cols are exactly zero.

    # --- MLP: fc1 -> GELU -> fc2 (dropout = identity in eval mode) ---
    # bf16 operands on the MXU, f32 accumulation; biases added in f32.
    h1 = jnp.dot(h.astype(jnp.bfloat16), w1_ref[...],
                 preferred_element_type=jnp.float32) + b1_ref[...]
    if use_tanh_gelu:
        h1 = jax.nn.gelu(h1, approximate=True)              # tanh -> EUP slot
    else:
        h1 = _gelu_exact(h1)                                # exact erf (PyTorch parity)
    h2 = jnp.dot(h1.astype(jnp.bfloat16), w2_ref[...],
                 preferred_element_type=jnp.float32) + b2_ref[...]

    # --- Gated attention: softmax(Linear(h2), dim=-1) * h2 ---
    logits = jnp.dot(h2.astype(jnp.bfloat16), wg_ref[...],
                     preferred_element_type=jnp.float32) + bg_ref[...]
    if padded:
        col = jax.lax.broadcasted_iota(jnp.int32, (tm, dp), 1)
        logits = jnp.where(col < d_valid, logits, -1e30)
    logits = logits - jnp.max(logits, axis=-1, keepdims=True)
    p = jnp.exp(logits)          # padded lanes underflow to exactly 0 after the shift
    attn = p * pl.reciprocal(jnp.sum(p, axis=-1, keepdims=True), approx=True)

    # --- Residual ---
    o_ref[...] = (h2 * attn + x).astype(o_ref.dtype)


def _pick_row_tile(n_rows, tm_target):
    """Largest multiple of 8 <= tm_target that divides n_rows (or None)."""
    t = min(tm_target, _round_up(n_rows, 8))
    t -= t % 8
    while t >= 8:
        if n_rows % t == 0:
            return t
        t -= 8
    return None


def feature_mixer_block(x, params, *, eps=1e-5, tm=512, use_tanh_gelu=False):
    """x: (B, C, P, D).  params: dict of f32 weights, (in, out) layout."""
    B, C, P, D = x.shape
    N = B * C * P
    H = params["w1"].shape[1]

    Dp = _round_up(D, 128)        # lane-dense features (== D if already aligned)
    Hp = _round_up(H, 128)

    # --- VMEM budget (generation-aware: 64 MiB on v7x, 128 MiB on v5e/v6e) ---
    try:
        vmem_cap = int(pltpu.get_tpu_info().vmem_capacity_bytes)
    except Exception:
        vmem_cap = 64 * 1024 * 1024                     # conservative fallback
    budget = int(vmem_cap * 0.75)

    x_itemsize = jnp.dtype(x.dtype).itemsize
    weight_bytes = 2 * (Dp * Hp + Hp * Dp + Dp * Dp) + 4 * (Hp + 3 * Dp)

    def tile_bytes(t):
        io = 2 * 2 * t * Dp * x_itemsize                # double-buffered in/out tiles
        interm = t * (4 * Dp + 2 * Hp) * 4              # rough f32 live intermediates
        return weight_bytes + io + interm

    # Target row tile: big enough to amortize per-step overhead, small enough for VMEM.
    tm_target = max(8, min(_round_up(tm, 8), _round_up(N, 8)))
    while tm_target > 8 and tile_bytes(tm_target) > budget:
        tm_target = max(8, (tm_target // 2) // 8 * 8)

    # Prefer a tile that divides N exactly -> no row padding, no output slice.
    tm_div = _pick_row_tile(N, tm_target)
    if tm_div is not None:
        tm_eff, Np = tm_div, N
    else:
        tm_eff = tm_target
        Np = _round_up(N, tm_eff)

    grid = (Np // tm_eff,)
    # NOTE: on v7x (2 TCs/chip) an even grid count balances the "parallel" axis
    # across both cores; we don't force it here to keep tiles large on v5e/v6e.

    # Activation: plain reshape (free); pad only if rows/features actually need it.
    x2d = x.reshape(N, D)
    if Np != N or Dp != D:
        x2d = jnp.pad(x2d, ((0, Np - N), (0, Dp - D)))

    def pad2(a, rows, cols, dtype):
        return jnp.pad(a, ((0, rows - a.shape[0]), (0, cols - a.shape[1]))).astype(dtype)

    ln_w = pad2(params["ln_w"], 1, Dp, jnp.float32)
    ln_b = pad2(params["ln_b"], 1, Dp, jnp.float32)
    w1 = pad2(params["w1"], Dp, Hp, jnp.bfloat16)
    b1 = pad2(params["b1"], 1, Hp, jnp.float32)
    w2 = pad2(params["w2"], Hp, Dp, jnp.bfloat16)
    b2 = pad2(params["b2"], 1, Dp, jnp.float32)
    wg = pad2(params["wg"], Dp, Dp, jnp.bfloat16)
    bg = pad2(params["bg"], 1, Dp, jnp.float32)

    # Weights/biases: whole-array resident in VMEM (constant across grid, single copy).
    vmem_full = pl.BlockSpec(memory_space=pltpu.MemorySpace.VMEM)

    needed = tile_bytes(tm_eff)
    vmem_limit = int(min(vmem_cap, max(needed + (needed >> 2), 32 * 1024 * 1024)))

    out2d = pl.pallas_call(
        functools.partial(feature_mixer_kernel, eps=eps, d_valid=D,
                          use_tanh_gelu=use_tanh_gelu),
        out_shape=jax.ShapeDtypeStruct((Np, Dp), x.dtype),
        grid_spec=pltpu.PrefetchScalarGridSpec(
            num_scalar_prefetch=0,
            grid=grid,
            in_specs=[
                pl.BlockSpec((tm_eff, Dp), lambda i: (i, 0)),   # x rows (pipelined)
                vmem_full, vmem_full,                           # layernorm w, b
                vmem_full, vmem_full,                           # fc1 w, b
                vmem_full, vmem_full,                           # fc2 w, b
                vmem_full, vmem_full,                           # attn w, b
            ],
            out_specs=pl.BlockSpec((tm_eff, Dp), lambda i: (i, 0)),
        ),
        compiler_params=pltpu.CompilerParams(
            dimension_semantics=("parallel",),
            vmem_limit_bytes=vmem_limit),
    )(x2d, ln_w, ln_b, w1, b1, w2, b2, wg, bg)

    if Np != N or Dp != D:
        out2d = out2d[:N, :D]
    return out2d.reshape(B, C, P, D)


def init_params(key, d_model, expansion_factor):
    """Deterministic synthetic init (shapes follow the PyTorch module)."""
    hidden = d_model * expansion_factor
    ks = jax.random.split(key, 6)
    s = 0.1
    return {
        "ln_w": jnp.ones((1, d_model), jnp.float32),
        "ln_b": jnp.zeros((1, d_model), jnp.float32),
        # stored as (in, out) = transpose of torch's (out, in)
        "w1": s * jax.random.normal(ks[0], (d_model, hidden), jnp.float32),
        "b1": s * jax.random.normal(ks[1], (1, hidden), jnp.float32),
        "w2": s * jax.random.normal(ks[2], (hidden, d_model), jnp.float32),
        "b2": s * jax.random.normal(ks[3], (1, d_model), jnp.float32),
        "wg": s * jax.random.normal(ks[4], (d_model, d_model), jnp.float32),
        "bg": s * jax.random.normal(ks[5], (1, d_model), jnp.float32),
    }


def reference(x, params, eps=1e-5):
    # Pure f32 JAX reference of the PyTorch forward (eval mode).
    mean = jnp.mean(x, -1, keepdims=True)
    var = jnp.mean((x - mean) ** 2, -1, keepdims=True)
    h = (x - mean) * jax.lax.rsqrt(var + eps) * params["ln_w"][0] + params["ln_b"][0]
    h1 = _gelu_exact(h @ params["w1"] + params["b1"][0])
    h2 = h1 @ params["w2"] + params["b2"][0]
    a = jax.nn.softmax(h2 @ params["wg"] + params["bg"][0], axis=-1)
    return h2 * a + x


if __name__ == "__main__":
    # Small shapes consistent with the module defaults:
    # (batch, num_channels, num_patches, d_model) with d_model=16.
    B, C, P, D = 2, 4, 8, 16
    expansion_factor = 2

    key = jax.random.PRNGKey(0)
    kx, kp = jax.random.split(key)
    x = jax.random.normal(kx, (B, C, P, D), jnp.float32)
    params = init_params(kp, D, expansion_factor)

    out = feature_mixer_block(x, params)
    out = jax.block_until_ready(out)

    ref = reference(x, params)
    assert out.shape == (B, C, P, D)
    # bf16 MXU operands + approx reciprocal => looser tolerance vs. f32 reference.
    assert jnp.allclose(out, ref, atol=2e-2, rtol=2e-2), "mismatch vs JAX reference"

    print("KERNEL_OK")
</pallas_src>

<mosaic_0001>
module attributes {stable_mosaic.version = 11 : i64} {
  func.func @feature_mixer_kernel(%arg0: i32, %arg1: memref<64x128xf32, #tpu.memory_space<vmem>>, %arg2: memref<1x128xf32, #tpu.memory_space<vmem>>, %arg3: memref<1x128xf32, #tpu.memory_space<vmem>>, %arg4: memref<128x128xbf16, #tpu.memory_space<vmem>>, %arg5: memref<1x128xf32, #tpu.memory_space<vmem>>, %arg6: memref<128x128xbf16, #tpu.memory_space<vmem>>, %arg7: memref<1x128xf32, #tpu.memory_space<vmem>>, %arg8: memref<128x128xbf16, #tpu.memory_space<vmem>>, %arg9: memref<1x128xf32, #tpu.memory_space<vmem>>, %arg10: memref<64x128xf32, #tpu.memory_space<vmem>>) attributes {dimension_semantics = [#tpu.dimension_semantics<parallel>], iteration_bounds = array<i64: 1>, scalar_prefetch = 0 : i64, scratch_operands = 0 : i64, tpu.core_type = #tpu.core_type<tc>, window_params = [{transform_indices = @transform_0, window_bounds = array<i64: 64, 128>}, {pipeline_mode = #tpu.pipeline_mode<synchronous>, transform_indices = @transform_1, window_bounds = array<i64: 1, 128>}, {pipeline_mode = #tpu.pipeline_mode<synchronous>, transform_indices = @transform_2, window_bounds = array<i64: 1, 128>}, {pipeline_mode = #tpu.pipeline_mode<synchronous>, transform_indices = @transform_3, window_bounds = array<i64: 128, 128>}, {pipeline_mode = #tpu.pipeline_mode<synchronous>, transform_indices = @transform_4, window_bounds = array<i64: 1, 128>}, {pipeline_mode = #tpu.pipeline_mode<synchronous>, transform_indices = @transform_5, window_bounds = array<i64: 128, 128>}, {pipeline_mode = #tpu.pipeline_mode<synchronous>, transform_indices = @transform_6, window_bounds = array<i64: 1, 128>}, {pipeline_mode = #tpu.pipeline_mode<synchronous>, transform_indices = @transform_7, window_bounds = array<i64: 128, 128>}, {pipeline_mode = #tpu.pipeline_mode<synchronous>, transform_indices = @transform_8, window_bounds = array<i64: 1, 128>}, {transform_indices = @transform_9, window_bounds = array<i64: 64, 128>}]} {
    %c0 = arith.constant 0 : index
    %c0_0 = arith.constant 0 : index
    %0 = vector.load %arg1[%c0, %c0_0] : memref<64x128xf32, #tpu.memory_space<vmem>>, vector<64x128xf32>
    %cst = arith.constant dense<0.000000e+00> : vector<64xf32>
    %1 = vector.multi_reduction <add>, %0, %cst [1] : vector<64x128xf32> to vector<64xf32>
    %2 = vector.shape_cast %1 : vector<64xf32> to vector<64x1xf32>
    %cst_1 = arith.constant 6.250000e-02 : f32
    %3 = vector.broadcast %cst_1 : f32 to vector<64x1xf32>
    %4 = arith.mulf %2, %3 : vector<64x1xf32>
    %5 = arith.mulf %0, %0 : vector<64x128xf32>
    %cst_2 = arith.constant dense<0.000000e+00> : vector<64xf32>
    %6 = vector.multi_reduction <add>, %5, %cst_2 [1] : vector<64x128xf32> to vector<64xf32>
    %7 = vector.shape_cast %6 : vector<64xf32> to vector<64x1xf32>
    %cst_3 = arith.constant 6.250000e-02 : f32
    %8 = vector.broadcast %cst_3 : f32 to vector<64x1xf32>
    %9 = arith.mulf %7, %8 : vector<64x1xf32>
    %10 = arith.mulf %4, %4 : vector<64x1xf32>
    %11 = arith.subf %9, %10 : vector<64x1xf32>
    %cst_4 = arith.constant 0.000000e+00 : f32
    %12 = vector.broadcast %cst_4 : f32 to vector<64x1xf32>
    %13 = arith.maximumf %11, %12 : vector<64x1xf32>
    %14 = vector.broadcast %4 : vector<64x1xf32> to vector<64x128xf32>
    %15 = arith.subf %0, %14 : vector<64x128xf32>
    %cst_5 = arith.constant 9.99999974E-6 : f32
    %16 = vector.broadcast %cst_5 : f32 to vector<64x1xf32>
    %17 = arith.addf %13, %16 : vector<64x1xf32>
    %18 = math.rsqrt %17 : vector<64x1xf32>
    %19 = vector.broadcast %18 : vector<64x1xf32> to vector<64x128xf32>
    %20 = arith.mulf %15, %19 : vector<64x128xf32>
    %c0_6 = arith.constant 0 : index
    %c0_7 = arith.constant 0 : index
    %21 = vector.load %arg2[%c0_6, %c0_7] : memref<1x128xf32, #tpu.memory_space<vmem>>, vector<1x128xf32>
    %22 = vector.broadcast %21 : vector<1x128xf32> to vector<64x128xf32>
    %23 = arith.mulf %20, %22 : vector<64x128xf32>
    %c0_8 = arith.constant 0 : index
    %c0_9 = arith.constant 0 : index
    %24 = vector.load %arg3[%c0_8, %c0_9] : memref<1x128xf32, #tpu.memory_space<vmem>>, vector<1x128xf32>
    %25 = vector.broadcast %24 : vector<1x128xf32> to vector<64x128xf32>
    %26 = arith.addf %23, %25 : vector<64x128xf32>
    %27 = arith.truncf %26 : vector<64x128xf32> to vector<64x128xbf16>
    %c0_10 = arith.constant 0 : index
    %c0_11 = arith.constant 0 : index
    %28 = vector.load %arg4[%c0_10, %c0_11] : memref<128x128xbf16, #tpu.memory_space<vmem>>, vector<128x128xbf16>
    %cst_12 = arith.constant dense<0.000000e+00> : vector<64x128xf32>
    %29 = tpu.matmul %27, %28, %cst_12 {dimension_numbers = #tpu.dot_dimension_numbers<[1], [0], [0], [1], [0, 0, 1, 1], [], []>} : vector<64x128xbf16>, vector<128x128xbf16>, vector<64x128xf32> -> vector<64x128xf32>
    %c0_13 = arith.constant 0 : index
    %c0_14 = arith.constant 0 : index
    %30 = vector.load %arg5[%c0_13, %c0_14] : memref<1x128xf32, #tpu.memory_space<vmem>>, vector<1x128xf32>
    %31 = vector.broadcast %30 : vector<1x128xf32> to vector<64x128xf32>
    %32 = arith.addf %29, %31 : vector<64x128xf32>
    %cst_15 = arith.constant 5.000000e-01 : f32
    %33 = vector.broadcast %cst_15 : f32 to vector<64x128xf32>
    %34 = arith.mulf %33, %32 : vector<64x128xf32>
    %cst_16 = arith.constant 2.000000e+00 : f32
    %35 = math.sqrt %cst_16 : f32
    %cst_17 = arith.constant 1.000000e+00 : f32
    %36 = arith.divf %cst_17, %35 : f32
    %37 = vector.broadcast %36 : f32 to vector<64x128xf32>
    %38 = arith.mulf %32, %37 : vector<64x128xf32>
    %39 = math.erf %38 : vector<64x128xf32>
    %cst_18 = arith.constant 1.000000e+00 : f32
    %40 = vector.broadcast %cst_18 : f32 to vector<64x128xf32>
    %41 = arith.addf %40, %39 : vector<64x128xf32>
    %42 = arith.mulf %34, %41 : vector<64x128xf32>
    %43 = arith.truncf %42 : vector<64x128xf32> to vector<64x128xbf16>
    %c0_19 = arith.constant 0 : index
    %c0_20 = arith.constant 0 : index
    %44 = vector.load %arg6[%c0_19, %c0_20] : memref<128x128xbf16, #tpu.memory_space<vmem>>, vector<128x128xbf16>
    %cst_21 = arith.constant dense<0.000000e+00> : vector<64x128xf32>
    %45 = tpu.matmul %43, %44, %cst_21 {dimension_numbers = #tpu.dot_dimension_numbers<[1], [0], [0], [1], [0, 0, 1, 1], [], []>} : vector<64x128xbf16>, vector<128x128xbf16>, vector<64x128xf32> -> vector<64x128xf32>
    %c0_22 = arith.constant 0 : index
    %c0_23 = arith.constant 0 : index
    %46 = vector.load %arg7[%c0_22, %c0_23] : memref<1x128xf32, #tpu.memory_space<vmem>>, vector<1x128xf32>
    %47 = vector.broadcast %46 : vector<1x128xf32> to vector<64x128xf32>
    %48 = arith.addf %45, %47 : vector<64x128xf32>
    %49 = arith.truncf %48 : vector<64x128xf32> to vector<64x128xbf16>
    %c0_24 = arith.constant 0 : index
    %c0_25 = arith.constant 0 : index
    %50 = vector.load %arg8[%c0_24, %c0_25] : memref<128x128xbf16, #tpu.memory_space<vmem>>, vector<128x128xbf16>
    %cst_26 = arith.constant dense<0.000000e+00> : vector<64x128xf32>
    %51 = tpu.matmul %49, %50, %cst_26 {dimension_numbers = #tpu.dot_dimension_numbers<[1], [0], [0], [1], [0, 0, 1, 1], [], []>} : vector<64x128xbf16>, vector<128x128xbf16>, vector<64x128xf32> -> vector<64x128xf32>
    %c0_27 = arith.constant 0 : index
    %c0_28 = arith.constant 0 : index
    %52 = vector.load %arg9[%c0_27, %c0_28] : memref<1x128xf32, #tpu.memory_space<vmem>>, vector<1x128xf32>
    %53 = vector.broadcast %52 : vector<1x128xf32> to vector<64x128xf32>
    %54 = arith.addf %51, %53 : vector<64x128xf32>
    %55 = tpu.iota {dimensions = array<i32: 1>} : vector<64x128xi32>
    %c16_i32 = arith.constant 16 : i32
    %56 = vector.broadcast %c16_i32 : i32 to vector<64x128xi32>
    %57 = arith.cmpi slt, %55, %56 : vector<64x128xi32>
    %cst_29 = arith.constant -1.000000e+30 : f32
    %58 = vector.broadcast %cst_29 : f32 to vector<64x128xf32>
    %59 = arith.select %57, %54, %58 : vector<64x128xi1>, vector<64x128xf32>
    %cst_30 = arith.constant dense<0xFF800000> : vector<64xf32>
    %60 = vector.multi_reduction <maximumf>, %59, %cst_30 [1] : vector<64x128xf32> to vector<64xf32>
    %61 = vector.shape_cast %60 : vector<64xf32> to vector<64x1xf32>
    %62 = vector.broadcast %61 : vector<64x1xf32> to vector<64x128xf32>
    %63 = arith.subf %59, %62 : vector<64x128xf32>
    %64 = math.exp %63 : vector<64x128xf32>
    %cst_31 = arith.constant dense<0.000000e+00> : vector<64xf32>
    %65 = vector.multi_reduction <add>, %64, %cst_31 [1] : vector<64x128xf32> to vector<64xf32>
    %66 = vector.shape_cast %65 : vector<64xf32> to vector<64x1xf32>
    %67 = tpu.reciprocal %66 {approx = true} : vector<64x1xf32> -> vector<64x1xf32>
    %68 = vector.broadcast %67 : vector<64x1xf32> to vector<64x128xf32>
    %69 = arith.mulf %64, %68 : vector<64x128xf32>
    %70 = arith.mulf %48, %69 : vector<64x128xf32>
    %71 = arith.addf %70, %0 : vector<64x128xf32>
    %c0_32 = arith.constant 0 : index
    %c0_33 = arith.constant 0 : index
    %72 = vector.load %arg10[%c0_32, %c0_33] : memref<64x128xf32, #tpu.memory_space<vmem>>, vector<64x128xf32>
    tpu.vector_store %arg10[%c0_32, %c0_33], %71 {strides = array<i32>} : memref<64x128xf32, #tpu.memory_space<vmem>>, vector<64x128xf32>,
    return
  }
  func.func @transform_0(%arg0: i32) -> (i32, i32) {
    %c0_i32 = arith.constant 0 : i32
    %c0_i32_0 = arith.constant 0 : i32
    return %arg0, %c0_i32 : i32, i32
  }
  func.func @transform_1(%arg0: i32) -> (i32, i32) {
    %c0_i32 = arith.constant 0 : i32
    %c0_i32_0 = arith.constant 0 : i32
    %c0_i32_1 = arith.constant 0 : i32
    return %c0_i32, %c0_i32_0 : i32, i32
  }
  func.func @transform_2(%arg0: i32) -> (i32, i32) {
    %c0_i32 = arith.constant 0 : i32
    %c0_i32_0 = arith.constant 0 : i32
    %c0_i32_1 = arith.constant 0 : i32
    return %c0_i32, %c0_i32_0 : i32, i32
  }
  func.func @transform_3(%arg0: i32) -> (i32, i32) {
    %c0_i32 = arith.constant 0 : i32
    %c0_i32_0 = arith.constant 0 : i32
    %c0_i32_1 = arith.constant 0 : i32
    return %c0_i32, %c0_i32_0 : i32, i32
  }
  func.func @transform_4(%arg0: i32) -> (i32, i32) {
    %c0_i32 = arith.constant 0 : i32
    %c0_i32_0 = arith.constant 0 : i32
    %c0_i32_1 = arith.constant 0 : i32
    return %c0_i32, %c0_i32_0 : i32, i32
  }
  func.func @transform_5(%arg0: i32) -> (i32, i32) {
    %c0_i32 = arith.constant 0 : i32
    %c0_i32_0 = arith.constant 0 : i32
    %c0_i32_1 = arith.constant 0 : i32
    return %c0_i32, %c0_i32_0 : i32, i32
  }
  func.func @transform_6(%arg0: i32) -> (i32, i32) {
    %c0_i32 = arith.constant 0 : i32
    %c0_i32_0 = arith.constant 0 : i32
    %c0_i32_1 = arith.constant 0 : i32
    return %c0_i32, %c0_i32_0 : i32, i32
  }
  func.func @transform_7(%arg0: i32) -> (i32, i32) {
    %c0_i32 = arith.constant 0 : i32
    %c0_i32_0 = arith.constant 0 : i32
    %c0_i32_1 = arith.constant 0 : i32
    return %c0_i32, %c0_i32_0 : i32, i32
  }
  func.func @transform_8(%arg0: i32) -> (i32, i32) {
    %c0_i32 = arith.constant 0 : i32
    %c0_i32_0 = arith.constant 0 : i32
    %c0_i32_1 = arith.constant 0 : i32
    return %c0_i32, %c0_i32_0 : i32, i32
  }
  func.func @transform_9(%arg0: i32) -> (i32, i32) {
    %c0_i32 = arith.constant 0 : i32
    %c0_i32_0 = arith.constant 0 : i32
    return %arg0, %c0_i32 : i32, i32
  }
}

</mosaic_0001>

<llo_original>
// kernel: tpu_custom_call.1
$region0: #{tpu_custom_call.1}
  #allocation0 [shape = 'u32[]', space=smem, size = 0x4, offset = 0x4, fixed_abs, tag = 'smem constant byte address 0x4 - core index']
  #allocation1 [shape = 'u32[144,128]{1,0:T(1,128)}', space=vmem, size = 0x12000, scoped, tag = 'internal scratch']
  %s0 = inlined_call_operand.hbm [shape: f32[64,128], index: 0, kind: input, shape index: {}]
  %s1 = inlined_call_operand.vmem [shape: f32[1,128], index: 1, kind: input, shape index: {}]
  %s2 = inlined_call_operand.vmem [shape: f32[1,128], index: 2, kind: input, shape index: {}]
  %s3 = inlined_call_operand.hbm [shape: bf16[128,128], index: 3, kind: input, shape index: {}]
  %s4 = inlined_call_operand.vmem [shape: f32[1,128], index: 4, kind: input, shape index: {}]
  %s5 = inlined_call_operand.hbm [shape: bf16[128,128], index: 5, kind: input, shape index: {}]
  %s6 = inlined_call_operand.vmem [shape: f32[1,128], index: 6, kind: input, shape index: {}]
  %s7 = inlined_call_operand.hbm [shape: bf16[128,128], index: 7, kind: input, shape index: {}]
  %s8 = inlined_call_operand.vmem [shape: f32[1,128], index: 8, kind: input, shape index: {}]
  %s9 = inlined_call_operand.hbm [shape: f32[64,128], index: 9, kind: output, shape index: {}]
  %s10 = sld [smem:[#allocation0]]
  $region62: #{tpu_custom_call.1} parent=0
    _
  %s12 = ssub.s32 1, %s10
  %s13 = scalar_select 0, %s12, %s10
  $region1: #{tpu_custom_call.1} parent=0
    #allocation2 [shape = 'u8[32768]{0}', space=vmem, size = 0x8000, scoped, tag = 'input window, operand 0, single buffered']
    #allocation3 [shape = 's32[1]{0}', space=sflag, size = 0x4, scoped, tag = 'scoped memory for tpu_custom_call.1']
    #allocation4 [shape = 's32[1]{0}', space=sflag, size = 0x4, scoped, tag = 'scoped memory for tpu_custom_call.1']
    #allocation5 [shape = 'u8[32768]{0}', space=vmem, size = 0x8000, scoped, tag = 'input window, operand 3, single buffered']
    #allocation6 [shape = 's32[1]{0}', space=sflag, size = 0x4, scoped, tag = 'scoped memory for tpu_custom_call.1']
    #allocation7 [shape = 'u8[32768]{0}', space=vmem, size = 0x8000, scoped, tag = 'input window, operand 5, single buffered']
    #allocation8 [shape = 'u8[32768]{0}', space=vmem, size = 0x8000, scoped, tag = 'input window, operand 7, single buffered']
    #allocation9 [shape = 's32[1]{0}', space=sflag, size = 0x4, scoped, tag = 'scoped memory for tpu_custom_call.1']
    #allocation10 [shape = 'u8[32768]{0}', space=vmem, size = 0x8000, scoped, tag = 'output window, operand 0, single buffered']
    %14 = vsyncpa [#allocation3], 0
    %15 = vsyncpa [#allocation6], 0
    %16 = vsyncpa [#allocation9], 0
    %17 = vsyncpa [#allocation4], 0
    // Predicated region
    $region2: #{tpu_custom_call.1} parent=1 // pred_check
      _
    $region3: #{tpu_custom_call.1} parent=1 // pred_check_branch
      %19 = sbr.rel (0) target = $region5
    $region4: #{tpu_custom_call.1} parent=1 // pred_region
      %s21 = ssub.s32 1024, 1024
      %22 = vsyncadd [#allocation3], %s21
      %s23 = sshll.u32 [#allocation2], 4
      %s24 = int_to_ptr.vmem [resolvable:$true] %s23
      %29 = dma.hbm_to_vmem [thread:$0]  %s0, 1024, %s24, [#allocation3], 128, 128, 8
    $region5: #{tpu_custom_call.1} parent=1 // pred_fallthru
      _
    // Predicated region
    $region6: #{tpu_custom_call.1} parent=1 // pred_check
      _
    $region7: #{tpu_custom_call.1} parent=1 // pred_check_branch
      %31 = sbr.rel (0) target = $region9
    $region8: #{tpu_custom_call.1} parent=1 // pred_region
      _
    $region9: #{tpu_custom_call.1} parent=1 // pred_fallthru
      _
    // Predicated region
    $region10: #{tpu_custom_call.1} parent=1 // pred_check
      _
    $region11: #{tpu_custom_call.1} parent=1 // pred_check_branch
      %33 = sbr.rel (0) target = $region13
    $region12: #{tpu_custom_call.1} parent=1 // pred_region
      _
    $region13: #{tpu_custom_call.1} parent=1 // pred_fallthru
      _
    // Predicated region
    $region14: #{tpu_custom_call.1} parent=1 // pred_check
      _
    $region15: #{tpu_custom_call.1} parent=1 // pred_check_branch
      %35 = sbr.rel (0) target = $region17
    $region16: #{tpu_custom_call.1} parent=1 // pred_region
      %s37 = ssub.s32 1024, 1024
      %38 = vsyncadd [#allocation6], %s37
      %s39 = sshll.u32 [#allocation5], 4
      %s40 = int_to_ptr.vmem [resolvable:$true] %s39
      %45 = dma.hbm_to_vmem [thread:$0]  %s3, 1024, %s40, [#allocation6], 64, 64, 4
    $region17: #{tpu_custom_call.1} parent=1 // pred_fallthru
      _
    // Predicated region
    $region18: #{tpu_custom_call.1} parent=1 // pred_check
      _
    $region19: #{tpu_custom_call.1} parent=1 // pred_check_branch
      %47 = sbr.rel (0) target = $region21
    $region20: #{tpu_custom_call.1} parent=1 // pred_region
      _
    $region21: #{tpu_custom_call.1} parent=1 // pred_fallthru
      _
    // Predicated region
    $region22: #{tpu_custom_call.1} parent=1 // pred_check
      _
    $region23: #{tpu_custom_call.1} parent=1 // pred_check_branch
      %49 = sbr.rel (0) target = $region25
    $region24: #{tpu_custom_call.1} parent=1 // pred_region
      %s51 = ssub.s32 1024, 1024
      %52 = vsyncadd [#allocation6], %s51
      %s53 = sshll.u32 [#allocation7], 4
      %s54 = int_to_ptr.vmem [resolvable:$true] %s53
      %59 = dma.hbm_to_vmem [thread:$0]  %s5, 1024, %s54, [#allocation6], 64, 64, 4
    $region25: #{tpu_custom_call.1} parent=1 // pred_fallthru
      _
    // Predicated region
    $region26: #{tpu_custom_call.1} parent=1 // pred_check
      _
    $region27: #{tpu_custom_call.1} parent=1 // pred_check_branch
      %61 = sbr.rel (0) target = $region29
    $region28: #{tpu_custom_call.1} parent=1 // pred_region
      _
    $region29: #{tpu_custom_call.1} parent=1 // pred_fallthru
      _
    // Predicated region
    $region30: #{tpu_custom_call.1} parent=1 // pred_check
      _
    $region31: #{tpu_custom_call.1} parent=1 // pred_check_branch
      %63 = sbr.rel (0) target = $region33
    $region32: #{tpu_custom_call.1} parent=1 // pred_region
      %s65 = ssub.s32 1024, 1024
      %66 = vsyncadd [#allocation9], %s65
      %s67 = sshll.u32 [#allocation8], 4
      %s68 = int_to_ptr.vmem [resolvable:$true] %s67
      %73 = dma.hbm_to_vmem [thread:$0]  %s7, 1024, %s68, [#allocation9], 64, 64, 4
    $region33: #{tpu_custom_call.1} parent=1 // pred_fallthru
      _
    // Predicated region
    $region34: #{tpu_custom_call.1} parent=1 // pred_check
      _
    $region35: #{tpu_custom_call.1} parent=1 // pred_check_branch
      %75 = sbr.rel (0) target = $region37
    $region36: #{tpu_custom_call.1} parent=1 // pred_region
      _
    $region37: #{tpu_custom_call.1} parent=1 // pred_fallthru
      _
    // Predicated region
    $region38: #{tpu_custom_call.1} parent=1 // pred_check
      _
    $region39: #{tpu_custom_call.1} parent=1 // pred_check_branch
      %77 = sbr.rel (0) target = $region41
    $region40: #{tpu_custom_call.1} parent=1 // pred_region
      %78 = dma.done [#allocation3], 1024
    $region41: #{tpu_custom_call.1} parent=1 // pred_fallthru
      _
    // Predicated region
    $region42: #{tpu_custom_call.1} parent=1 // pred_check
      _
    $region43: #{tpu_custom_call.1} parent=1 // pred_check_branch
      %80 = sbr.rel (0) target = $region45
    $region44: #{tpu_custom_call.1} parent=1 // pred_region
      %81 = dma.done [#allocation6], 1024
    $region45: #{tpu_custom_call.1} parent=1 // pred_fallthru
      _
    // Predicated region
    $region46: #{tpu_custom_call.1} parent=1 // pred_check
      _
    $region47: #{tpu_custom_call.1} parent=1 // pred_check_branch
      %83 = sbr.rel (0) target = $region49
    $region48: #{tpu_custom_call.1} parent=1 // pred_region
      %84 = dma.done [#allocation6], 1024
    $region49: #{tpu_custom_call.1} parent=1 // pred_fallthru
      _
    // Predicated region
    $region50: #{tpu_custom_call.1} parent=1 // pred_check
      _
    $region51: #{tpu_custom_call.1} parent=1 // pred_check_branch
      %86 = sbr.rel (0) target = $region53
    $region52: #{tpu_custom_call.1} parent=1 // pred_region
      %87 = dma.done [#allocation9], 1024
    $region53: #{tpu_custom_call.1} parent=1 // pred_fallthru
      _
    %v89 = vld [vmem:[#allocation2] sm:$0xff]
    %v90 = vld [vmem:[#allocation2 + $0x8] sm:$0xff]
    %v91 = vld [vmem:[#allocation2 + $0x10] sm:$0xff]
    %v92 = vld [vmem:[#allocation2 + $0x18] sm:$0xff]
    %v93 = vld [vmem:[#allocation2 + $0x20] sm:$0xff]
    %v94 = vld [vmem:[#allocation2 + $0x28] sm:$0xff]
    %v95 = vld [vmem:[#allocation2 + $0x30] sm:$0xff]
    %v96 = vld [vmem:[#allocation2 + $0x38] sm:$0xff]
    %97 = vadd.xlane.f32.xlu0 %v89
    %v98 = vpop.xlane.xlu0 %97
    %99 = vadd.xlane.f32.xlu0 %v90
    %v100 = vpop.xlane.xlu0 %99
    %101 = vadd.xlane.f32.xlu0 %v91
    %v102 = vpop.xlane.xlu0 %101
    %103 = vadd.xlane.f32.xlu0 %v92
    %v104 = vpop.xlane.xlu0 %103
    %105 = vadd.xlane.f32.xlu0 %v93
    %v106 = vpop.xlane.xlu0 %105
    %107 = vadd.xlane.f32.xlu0 %v94
    %v108 = vpop.xlane.xlu0 %107
    %109 = vadd.xlane.f32.xlu0 %v95
    %v110 = vpop.xlane.xlu0 %109
    %111 = vadd.xlane.f32.xlu0 %v96
    %v112 = vpop.xlane.xlu0 %111
    %v113 = vmul.f32 %v98, 0.0625
    %v114 = vmul.f32 %v100, 0.0625
    %v115 = vmul.f32 %v102, 0.0625
    %v116 = vmul.f32 %v104, 0.0625
    %v117 = vmul.f32 %v106, 0.0625
    %v118 = vmul.f32 %v108, 0.0625
    %v119 = vmul.f32 %v110, 0.0625
    %v120 = vmul.f32 %v112, 0.0625
    %v121 = vmul.f32 %v89, %v89
    %v122 = vmul.f32 %v90, %v90
    %v123 = vmul.f32 %v91, %v91
    %v124 = vmul.f32 %v92, %v92
    %v125 = vmul.f32 %v93, %v93
    %v126 = vmul.f32 %v94, %v94
    %v127 = vmul.f32 %v95, %v95
    %v128 = vmul.f32 %v96, %v96
    %129 = vadd.xlane.f32.xlu0 %v121
    %v130 = vpop.xlane.xlu0 %129
    %131 = vadd.xlane.f32.xlu0 %v122
    %v132 = vpop.xlane.xlu0 %131
    %133 = vadd.xlane.f32.xlu0 %v123
    %v134 = vpop.xlane.xlu0 %133
    %135 = vadd.xlane.f32.xlu0 %v124
    %v136 = vpop.xlane.xlu0 %135
    %137 = vadd.xlane.f32.xlu0 %v125
    %v138 = vpop.xlane.xlu0 %137
    %139 = vadd.xlane.f32.xlu0 %v126
    %v140 = vpop.xlane.xlu0 %139
    %141 = vadd.xlane.f32.xlu0 %v127
    %v142 = vpop.xlane.xlu0 %141
    %143 = vadd.xlane.f32.xlu0 %v128
    %v144 = vpop.xlane.xlu0 %143
    %v145 = vmul.f32 %v130, 0.0625
    %v146 = vmul.f32 %v132, 0.0625
    %v147 = vmul.f32 %v134, 0.0625
    %v148 = vmul.f32 %v136, 0.0625
    %v149 = vmul.f32 %v138, 0.0625
    %v150 = vmul.f32 %v140, 0.0625
    %v151 = vmul.f32 %v142, 0.0625
    %v152 = vmul.f32 %v144, 0.0625
    %v153 = vmul.f32 %v113, %v113
    %v154 = vmul.f32 %v114, %v114
    %v155 = vmul.f32 %v115, %v115
    %v156 = vmul.f32 %v116, %v116
    %v157 = vmul.f32 %v117, %v117
    %v158 = vmul.f32 %v118, %v118
    %v159 = vmul.f32 %v119, %v119
    %v160 = vmul.f32 %v120, %v120
    %v161 = vsub.f32 %v145, %v153
    %v162 = vsub.f32 %v146, %v154
    %v163 = vsub.f32 %v147, %v155
    %v164 = vsub.f32 %v148, %v156
    %v165 = vsub.f32 %v149, %v157
    %v166 = vsub.f32 %v150, %v158
    %v167 = vsub.f32 %v151, %v159
    %v168 = vsub.f32 %v152, %v160
    %v169 = vmax.f32 %v161, 0.0
    %v170 = vmax.f32 %v162, 0.0
    %v171 = vmax.f32 %v163, 0.0
    %v172 = vmax.f32 %v164, 0.0
    %v173 = vmax.f32 %v165, 0.0
    %v174 = vmax.f32 %v166, 0.0
    %v175 = vmax.f32 %v167, 0.0
    %v176 = vmax.f32 %v168, 0.0
    %v177 = vsub.f32 %v89, %v113
    %v178 = vsub.f32 %v90, %v114
    %v179 = vsub.f32 %v91, %v115
    %v180 = vsub.f32 %v92, %v116
    %v181 = vsub.f32 %v93, %v117
    %v182 = vsub.f32 %v94, %v118
    %v183 = vsub.f32 %v95, %v119
    %v184 = vsub.f32 %v96, %v120
    %v185 = vadd.f32 %v169, 1e-05
    %v186 = vadd.f32 %v170, 1e-05
    %v187 = vadd.f32 %v171, 1e-05
    %v188 = vadd.f32 %v172, 1e-05
    %v189 = vadd.f32 %v173, 1e-05
    %v190 = vadd.f32 %v174, 1e-05
    %v191 = vadd.f32 %v175, 1e-05
    %v192 = vadd.f32 %v176, 1e-05
    %v193 = vrsqrt.pop %v185
    %v194 = vrsqrt.pop %v186
    %v195 = vrsqrt.pop %v187
    %v196 = vrsqrt.pop %v188
    %v197 = vrsqrt.pop %v189
    %v198 = vrsqrt.pop %v190
    %v199 = vrsqrt.pop %v191
    %v200 = vrsqrt.pop %v192
    %v201 = vmul.f32 %v177, %v193
    %v202 = vmul.f32 %v178, %v194
    %v203 = vmul.f32 %v179, %v195
    %v204 = vmul.f32 %v180, %v196
    %v205 = vmul.f32 %v181, %v197
    %v206 = vmul.f32 %v182, %v198
    %v207 = vmul.f32 %v183, %v199
    %v208 = vmul.f32 %v184, %v200
    %v209 = vld [vmem:[%s1] sm:$0x1]
    %v211 = vlaneseq
    %v212 = vshrl.u32 %v211, 7
    %v213 = vsub.s32 0, %v212
    %v214 = vrot.slane %v209, %v213
    %v216 = vmul.f32 %v201, %v214
    %v217 = vmul.f32 %v202, %v214
    %v218 = vmul.f32 %v203, %v214
    %v219 = vmul.f32 %v204, %v214
    %v220 = vmul.f32 %v205, %v214
    %v221 = vmul.f32 %v206, %v214
    %v222 = vmul.f32 %v207, %v214
    %v223 = vmul.f32 %v208, %v214
    %v224 = vld [vmem:[%s2] sm:$0x1]
    %v226 = vlaneseq
    %v227 = vshrl.u32 %v226, 7
    %v228 = vsub.s32 0, %v227
    %v229 = vrot.slane %v224, %v228
    %v231 = vadd.f32 %v216, %v229
    %v232 = vadd.f32 %v217, %v229
    %v233 = vadd.f32 %v218, %v229
    %v234 = vadd.f32 %v219, %v229
    %v235 = vadd.f32 %v220, %v229
    %v236 = vadd.f32 %v221, %v229
    %v237 = vadd.f32 %v222, %v229
    %v238 = vadd.f32 %v223, %v229
    %v239 = vpack.c.bf16 %v232, %v231
    %v240 = vpack.c.bf16 %v234, %v233
    %v241 = vpack.c.bf16 %v236, %v235
    %v242 = vpack.c.bf16 %v238, %v237
    %v243 = vld [vmem:[#allocation5] sm:$0xf]
    %v244 = vld [vmem:[#allocation5 + $0x4] sm:$0xf]
    %v245 = vld [vmem:[#allocation5 + $0x8] sm:$0xf]
    %v246 = vld [vmem:[#allocation5 + $0xc] sm:$0xf]
    %v247 = vld [vmem:[#allocation5 + $0x10] sm:$0xf]
    %v248 = vld [vmem:[#allocation5 + $0x14] sm:$0xf]
    %v249 = vld [vmem:[#allocation5 + $0x18] sm:$0xf]
    %v250 = vld [vmem:[#allocation5 + $0x1c] sm:$0xf]
    %v251 = vld [vmem:[#allocation5 + $0x20] sm:$0xf]
    %v252 = vld [vmem:[#allocation5 + $0x24] sm:$0xf]
    %v253 = vld [vmem:[#allocation5 + $0x28] sm:$0xf]
    %v254 = vld [vmem:[#allocation5 + $0x2c] sm:$0xf]
    %v255 = vld [vmem:[#allocation5 + $0x30] sm:$0xf]
    %v256 = vld [vmem:[#allocation5 + $0x34] sm:$0xf]
    %v257 = vld [vmem:[#allocation5 + $0x38] sm:$0xf]
    %v258 = vld [vmem:[#allocation5 + $0x3c] sm:$0xf]
    %v259 = vld [vmem:[%s4] sm:$0x1]
    %v261 = vlaneseq
    %v262 = vshrl.u32 %v261, 7
    %v263 = vsub.s32 0, %v262
    %v264 = vrot.slane %v259, %v263
    %v282 = vunpack.c.l.b16 %v243
    %v283 = vunpack.c.l.b16 %v244
    %v284 = vunpack.c.l.b16 %v245
    %v285 = vunpack.c.l.b16 %v246
    %v286 = vunpack.c.l.b16 %v247
    %v287 = vunpack.c.l.b16 %v248
    %v288 = vunpack.c.l.b16 %v249
    %v289 = vunpack.c.l.b16 %v250
    %v290 = vunpack.c.l.b16 %v251
    %v291 = vunpack.c.l.b16 %v252
    %v292 = vunpack.c.l.b16 %v253
    %v293 = vunpack.c.l.b16 %v254
    %v294 = vunpack.c.l.b16 %v255
    %v295 = vunpack.c.l.b16 %v256
    %v296 = vunpack.c.l.b16 %v257
    %v297 = vunpack.c.l.b16 %v258
    %v298 = vpack.c.b16 %v283, %v282
    %v299 = vpack.c.b16 %v285, %v284
    %v300 = vpack.c.b16 %v287, %v286
    %v301 = vpack.c.b16 %v289, %v288
    %v302 = vpack.c.b16 %v291, %v290
    %v303 = vpack.c.b16 %v293, %v292
    %v304 = vpack.c.b16 %v295, %v294
    %v305 = vpack.c.b16 %v297, %v296
    %314 = vmatprep.subr.bf16.mxu0 0
    %315 = vmatpush1.bf16.msra.mxu0 %v305
    %316 = vmatprep.subr.bf16.mxu0 0
    %317 = vmatpush1.bf16.msra.mxu0 %v304
    %318 = vmatprep.subr.bf16.mxu0 0
    %319 = vmatpush1.bf16.msra.mxu0 %v303
    %320 = vmatprep.subr.bf16.mxu0 0
    %321 = vmatpush1.bf16.msra.mxu0 %v302
    %322 = vmatprep.subr.bf16.mxu0 0
    %323 = vmatpush1.bf16.msra.mxu0 %v301
    %324 = vmatprep.subr.bf16.mxu0 0
    %325 = vmatpush1.bf16.msra.mxu0 %v300
    %326 = vmatprep.subr.bf16.mxu0 0
    %327 = vmatpush1.bf16.msra.mxu0 %v299
    %328 = vmatprep.subr.bf16.mxu0 0
    %329 = vmatpush1.bf16.msra.mxu0 %v298
    %330 = vmatprep.subr.bf16.mxu0 0
    %331 = vmatpush2.bf16.msra.mxu0 0
    %332 = vmatprep.subr.bf16.mxu0 0
    %333 = vmatpush2.bf16.msra.mxu0 0
    %334 = vmatprep.subr.bf16.mxu0 0
    %335 = vmatpush2.bf16.msra.mxu0 0
    %336 = vmatprep.subr.bf16.mxu0 0
    %337 = vmatpush2.bf16.msra.mxu0 0
    %338 = vmatprep.subr.bf16.mxu0 0
    %339 = vmatpush2.bf16.msra.mxu0 0
    %340 = vmatprep.subr.bf16.mxu0 0
    %341 = vmatpush2.bf16.msra.mxu0 0
    %342 = vmatprep.subr.bf16.mxu0 0
    %343 = vmatpush2.bf16.msra.mxu0 0
    %344 = vmatprep.subr.bf16.mxu0 0
    %345 = vmatpush2.bf16.msra.mxu0 0
    %346 = vmatprep.mubr.bf16.mxu0 0
    %347 = vmatmul.mubr.bf16.gmra.mxu0 %v239
    %v348 = vpop.f32.mrf.mxu0
    %v349 = vadd.f32 %v264, %v348
    %v350 = vpop.f32.mrf.mxu0
    %v351 = vpop.f32.mrf.mxu0
    %v352 = vadd.f32 %v264, %v351
    %v353 = vpop.f32.mrf.mxu0
    %354 = vmatprep.mubr.bf16.mxu0 0
    %355 = vmatmul.mubr.bf16.gmra.mxu0 %v240
    %v356 = vpop.f32.mrf.mxu0
    %v357 = vadd.f32 %v264, %v356
    %v358 = vpop.f32.mrf.mxu0
    %v359 = vpop.f32.mrf.mxu0
    %v360 = vadd.f32 %v264, %v359
    %v361 = vpop.f32.mrf.mxu0
    %362 = vmatprep.mubr.bf16.mxu0 0
    %363 = vmatmul.mubr.bf16.gmra.mxu0 %v241
    %v364 = vpop.f32.mrf.mxu0
    %v365 = vadd.f32 %v264, %v364
    %v366 = vpop.f32.mrf.mxu0
    %v367 = vpop.f32.mrf.mxu0
    %v368 = vadd.f32 %v264, %v367
    %v369 = vpop.f32.mrf.mxu0
    %370 = vmatprep.mubr.bf16.mxu0 0
    %371 = vmatmul.mubr.bf16.gmra.mxu0 %v242
    %v372 = vpop.f32.mrf.mxu0
    %v373 = vadd.f32 %v264, %v372
    %v374 = vpop.f32.mrf.mxu0
    %v375 = vpop.f32.mrf.mxu0
    %v376 = vadd.f32 %v264, %v375
    %v377 = vpop.f32.mrf.mxu0
    %378 = vdwg.mxu0
    %v379 = vmul.f32 %v349, 0.5
    %v380 = vmul.f32 %v352, 0.5
    %v381 = vmul.f32 %v357, 0.5
    %v382 = vmul.f32 %v360, 0.5
    %v383 = vmul.f32 %v365, 0.5
    %v384 = vmul.f32 %v368, 0.5
    %v385 = vmul.f32 %v373, 0.5
    %v386 = vmul.f32 %v376, 0.5
    %v387 = vmul.f32 %v349, 0.70710677
    %v388 = vmul.f32 %v352, 0.70710677
    %v389 = vmul.f32 %v357, 0.70710677
    %v390 = vmul.f32 %v360, 0.70710677
    %v391 = vmul.f32 %v365, 0.70710677
    %v392 = vmul.f32 %v368, 0.70710677
    %v393 = vmul.f32 %v373, 0.70710677
    %v394 = vmul.f32 %v376, 0.70710677
    %v395 = verf.f32.pop %v387
    %v396 = verf.f32.pop %v388
    %v397 = verf.f32.pop %v389
    %v398 = verf.f32.pop %v390
    %v399 = verf.f32.pop %v391
    %v400 = verf.f32.pop %v392
    %v401 = verf.f32.pop %v393
    %v402 = verf.f32.pop %v394
    %v403 = vadd.f32 %v395, 1.0
    %v404 = vadd.f32 %v396, 1.0
    %v405 = vadd.f32 %v397, 1.0
    %v406 = vadd.f32 %v398, 1.0
    %v407 = vadd.f32 %v399, 1.0
    %v408 = vadd.f32 %v400, 1.0
    %v409 = vadd.f32 %v401, 1.0
    %v410 = vadd.f32 %v402, 1.0
    %v411 = vmul.f32 %v379, %v403
    %v412 = vmul.f32 %v380, %v404
    %v413 = vmul.f32 %v381, %v405
    %v414 = vmul.f32 %v382, %v406
    %v415 = vmul.f32 %v383, %v407
    %v416 = vmul.f32 %v384, %v408
    %v417 = vmul.f32 %v385, %v409
    %v418 = vmul.f32 %v386, %v410
    %v419 = vpack.c.bf16 %v412, %v411
    %v420 = vpack.c.bf16 %v414, %v413
    %v421 = vpack.c.bf16 %v416, %v415
    %v422 = vpack.c.bf16 %v418, %v417
    %v423 = vld [vmem:[#allocation7] sm:$0xf]
    %v424 = vld [vmem:[#allocation7 + $0x4] sm:$0xf]
    %v425 = vld [vmem:[#allocation7 + $0x8] sm:$0xf]
    %v426 = vld [vmem:[#allocation7 + $0xc] sm:$0xf]
    %v427 = vld [vmem:[#allocation7 + $0x10] sm:$0xf]
    %v428 = vld [vmem:[#allocation7 + $0x14] sm:$0xf]
    %v429 = vld [vmem:[#allocation7 + $0x18] sm:$0xf]
    %v430 = vld [vmem:[#allocation7 + $0x1c] sm:$0xf]
    %v431 = vld [vmem:[#allocation7 + $0x20] sm:$0xf]
    %v432 = vld [vmem:[#allocation7 + $0x24] sm:$0xf]
    %v433 = vld [vmem:[#allocation7 + $0x28] sm:$0xf]
    %v434 = vld [vmem:[#allocation7 + $0x2c] sm:$0xf]
    %v435 = vld [vmem:[#allocation7 + $0x30] sm:$0xf]
    %v436 = vld [vmem:[#allocation7 + $0x34] sm:$0xf]
    %v437 = vld [vmem:[#allocation7 + $0x38] sm:$0xf]
    %v438 = vld [vmem:[#allocation7 + $0x3c] sm:$0xf]
    %v439 = vld [vmem:[%s6] sm:$0x1]
    %v441 = vlaneseq
    %v442 = vshrl.u32 %v441, 7
    %v443 = vsub.s32 0, %v442
    %v444 = vrot.slane %v439, %v443
    %v462 = vunpack.c.l.b16 %v423
    %v463 = vunpack.c.l.b16 %v424
    %v464 = vunpack.c.l.b16 %v425
    %v465 = vunpack.c.l.b16 %v426
    %v466 = vunpack.c.l.b16 %v427
    %v467 = vunpack.c.l.b16 %v428
    %v468 = vunpack.c.l.b16 %v429
    %v469 = vunpack.c.l.b16 %v430
    %v470 = vunpack.c.l.b16 %v431
    %v471 = vunpack.c.l.b16 %v432
    %v472 = vunpack.c.l.b16 %v433
    %v473 = vunpack.c.l.b16 %v434
    %v474 = vunpack.c.l.b16 %v435
    %v475 = vunpack.c.l.b16 %v436
    %v476 = vunpack.c.l.b16 %v437
    %v477 = vunpack.c.l.b16 %v438
    %v478 = vpack.c.b16 %v463, %v462
    %v479 = vpack.c.b16 %v465, %v464
    %v480 = vpack.c.b16 %v467, %v466
    %v481 = vpack.c.b16 %v469, %v468
    %v482 = vpack.c.b16 %v471, %v470
    %v483 = vpack.c.b16 %v473, %v472
    %v484 = vpack.c.b16 %v475, %v474
    %v485 = vpack.c.b16 %v477, %v476
    %494 = vmatprep.subr.bf16.mxu0 0
    %495 = vmatpush1.bf16.msra.mxu0 %v485
    %496 = vmatprep.subr.bf16.mxu0 0
    %497 = vmatpush1.bf16.msra.mxu0 %v484
    %498 = vmatprep.subr.bf16.mxu0 0
    %499 = vmatpush1.bf16.msra.mxu0 %v483
    %500 = vmatprep.subr.bf16.mxu0 0
    %501 = vmatpush1.bf16.msra.mxu0 %v482
    %502 = vmatprep.subr.bf16.mxu0 0
    %503 = vmatpush1.bf16.msra.mxu0 %v481
    %504 = vmatprep.subr.bf16.mxu0 0
    %505 = vmatpush1.bf16.msra.mxu0 %v480
    %506 = vmatprep.subr.bf16.mxu0 0
    %507 = vmatpush1.bf16.msra.mxu0 %v479
    %508 = vmatprep.subr.bf16.mxu0 0
    %509 = vmatpush1.bf16.msra.mxu0 %v478
    %510 = vmatprep.subr.bf16.mxu0 0
    %511 = vmatpush2.bf16.msra.mxu0 0
    %512 = vmatprep.subr.bf16.mxu0 0
    %513 = vmatpush2.bf16.msra.mxu0 0
    %514 = vmatprep.subr.bf16.mxu0 0
    %515 = vmatpush2.bf16.msra.mxu0 0
    %516 = vmatprep.subr.bf16.mxu0 0
    %517 = vmatpush2.bf16.msra.mxu0 0
    %518 = vmatprep.subr.bf16.mxu0 0
    %519 = vmatpush2.bf16.msra.mxu0 0
    %520 = vmatprep.subr.bf16.mxu0 0
    %521 = vmatpush2.bf16.msra.mxu0 0
    %522 = vmatprep.subr.bf16.mxu0 0
    %523 = vmatpush2.bf16.msra.mxu0 0
    %524 = vmatprep.subr.bf16.mxu0 0
    %525 = vmatpush2.bf16.msra.mxu0 0
    %526 = vmatprep.mubr.bf16.mxu0 0
    %527 = vmatmul.mubr.bf16.gmra.mxu0 %v419
    %v528 = vpop.f32.mrf.mxu0
    %v529 = vadd.f32 %v444, %v528
    %v530 = vpop.f32.mrf.mxu0
    %v531 = vpop.f32.mrf.mxu0
    %v532 = vadd.f32 %v444, %v531
    %v533 = vpop.f32.mrf.mxu0
    %534 = vmatprep.mubr.bf16.mxu0 0
    %535 = vmatmul.mubr.bf16.gmra.mxu0 %v420
    %v536 = vpop.f32.mrf.mxu0
    %v537 = vadd.f32 %v444, %v536
    %v538 = vpop.f32.mrf.mxu0
    %v539 = vpop.f32.mrf.mxu0
    %v540 = vadd.f32 %v444, %v539
    %v541 = vpop.f32.mrf.mxu0
    %542 = vmatprep.mubr.bf16.mxu0 0
    %543 = vmatmul.mubr.bf16.gmra.mxu0 %v421
    %v544 = vpop.f32.mrf.mxu0
    %v545 = vadd.f32 %v444, %v544
    %v546 = vpop.f32.mrf.mxu0
    %v547 = vpop.f32.mrf.mxu0
    %v548 = vadd.f32 %v444, %v547
    %v549 = vpop.f32.mrf.mxu0
    %550 = vmatprep.mubr.bf16.mxu0 0
    %551 = vmatmul.mubr.bf16.gmra.mxu0 %v422
    %v552 = vpop.f32.mrf.mxu0
    %v553 = vadd.f32 %v444, %v552
    %v554 = vpop.f32.mrf.mxu0
    %v555 = vpop.f32.mrf.mxu0
    %v556 = vadd.f32 %v444, %v555
    %v557 = vpop.f32.mrf.mxu0
    %558 = vdwg.mxu0
    %v559 = vpack.c.bf16 %v532, %v529
    %v560 = vpack.c.bf16 %v540, %v537
    %v561 = vpack.c.bf16 %v548, %v545
    %v562 = vpack.c.bf16 %v556, %v553
    %v563 = vld [vmem:[#allocation8] sm:$0xf]
    %v564 = vld [vmem:[#allocation8 + $0x4] sm:$0xf]
    %v565 = vld [vmem:[#allocation8 + $0x8] sm:$0xf]
    %v566 = vld [vmem:[#allocation8 + $0xc] sm:$0xf]
    %v567 = vld [vmem:[#allocation8 + $0x10] sm:$0xf]
    %v568 = vld [vmem:[#allocation8 + $0x14] sm:$0xf]
    %v569 = vld [vmem:[#allocation8 + $0x18] sm:$0xf]
    %v570 = vld [vmem:[#allocation8 + $0x1c] sm:$0xf]
    %v571 = vld [vmem:[#allocation8 + $0x20] sm:$0xf]
    %v572 = vld [vmem:[#allocation8 + $0x24] sm:$0xf]
    %v573 = vld [vmem:[#allocation8 + $0x28] sm:$0xf]
    %v574 = vld [vmem:[#allocation8 + $0x2c] sm:$0xf]
    %v575 = vld [vmem:[#allocation8 + $0x30] sm:$0xf]
    %v576 = vld [vmem:[#allocation8 + $0x34] sm:$0xf]
    %v577 = vld [vmem:[#allocation8 + $0x38] sm:$0xf]
    %v578 = vld [vmem:[#allocation8 + $0x3c] sm:$0xf]
    %v579 = vld [vmem:[%s8] sm:$0x1]
    %v581 = vlaneseq
    %v582 = vshrl.u32 %v581, 7
    %v583 = vsub.s32 0, %v582
    %v584 = vrot.slane %v579, %v583
    %v602 = vunpack.c.l.b16 %v563
    %v603 = vunpack.c.l.b16 %v564
    %v604 = vunpack.c.l.b16 %v565
    %v605 = vunpack.c.l.b16 %v566
    %v606 = vunpack.c.l.b16 %v567
    %v607 = vunpack.c.l.b16 %v568
    %v608 = vunpack.c.l.b16 %v569
    %v609 = vunpack.c.l.b16 %v570
    %v610 = vunpack.c.l.b16 %v571
    %v611 = vunpack.c.l.b16 %v572
    %v612 = vunpack.c.l.b16 %v573
    %v613 = vunpack.c.l.b16 %v574
    %v614 = vunpack.c.l.b16 %v575
    %v615 = vunpack.c.l.b16 %v576
    %v616 = vunpack.c.l.b16 %v577
    %v617 = vunpack.c.l.b16 %v578
    %v618 = vpack.c.b16 %v603, %v602
    %v619 = vpack.c.b16 %v605, %v604
    %v620 = vpack.c.b16 %v607, %v606
    %v621 = vpack.c.b16 %v609, %v608
    %v622 = vpack.c.b16 %v611, %v610
    %v623 = vpack.c.b16 %v613, %v612
    %v624 = vpack.c.b16 %v615, %v614
    %v625 = vpack.c.b16 %v617, %v616
    %634 = vmatprep.subr.bf16.mxu0 0
    %635 = vmatpush1.bf16.msra.mxu0 %v625
    %636 = vmatprep.subr.bf16.mxu0 0
    %637 = vmatpush1.bf16.msra.mxu0 %v624
    %638 = vmatprep.subr.bf16.mxu0 0
    %639 = vmatpush1.bf16.msra.mxu0 %v623
    %640 = vmatprep.subr.bf16.mxu0 0
    %641 = vmatpush1.bf16.msra.mxu0 %v622
    %642 = vmatprep.subr.bf16.mxu0 0
    %643 = vmatpush1.bf16.msra.mxu0 %v621
    %644 = vmatprep.subr.bf16.mxu0 0
    %645 = vmatpush1.bf16.msra.mxu0 %v620
    %646 = vmatprep.subr.bf16.mxu0 0
    %647 = vmatpush1.bf16.msra.mxu0 %v619
    %648 = vmatprep.subr.bf16.mxu0 0
    %649 = vmatpush1.bf16.msra.mxu0 %v618
    %650 = vmatprep.subr.bf16.mxu0 0
    %651 = vmatpush2.bf16.msra.mxu0 0
    %652 = vmatprep.subr.bf16.mxu0 0
    %653 = vmatpush2.bf16.msra.mxu0 0
    %654 = vmatprep.subr.bf16.mxu0 0
    %655 = vmatpush2.bf16.msra.mxu0 0
    %656 = vmatprep.subr.bf16.mxu0 0
    %657 = vmatpush2.bf16.msra.mxu0 0
    %658 = vmatprep.subr.bf16.mxu0 0
    %659 = vmatpush2.bf16.msra.mxu0 0
    %660 = vmatprep.subr.bf16.mxu0 0
    %661 = vmatpush2.bf16.msra.mxu0 0
    %662 = vmatprep.subr.bf16.mxu0 0
    %663 = vmatpush2.bf16.msra.mxu0 0
    %664 = vmatprep.subr.bf16.mxu0 0
    %665 = vmatpush2.bf16.msra.mxu0 0
    %666 = vmatprep.mubr.bf16.mxu0 0
    %667 = vmatmul.mubr.bf16.gmra.mxu0 %v559
    %v668 = vpop.f32.mrf.mxu0
    %v669 = vadd.f32 %v584, %v668
    %v670 = vpop.f32.mrf.mxu0
    %v671 = vpop.f32.mrf.mxu0
    %v672 = vadd.f32 %v584, %v671
    %v673 = vpop.f32.mrf.mxu0
    %674 = vmatprep.mubr.bf16.mxu0 0
    %675 = vmatmul.mubr.bf16.gmra.mxu0 %v560
    %v676 = vpop.f32.mrf.mxu0
    %v677 = vadd.f32 %v584, %v676
    %v678 = vpop.f32.mrf.mxu0
    %v679 = vpop.f32.mrf.mxu0
    %v680 = vadd.f32 %v584, %v679
    %v681 = vpop.f32.mrf.mxu0
    %682 = vmatprep.mubr.bf16.mxu0 0
    %683 = vmatmul.mubr.bf16.gmra.mxu0 %v561
    %v684 = vpop.f32.mrf.mxu0
    %v685 = vadd.f32 %v584, %v684
    %v686 = vpop.f32.mrf.mxu0
    %v687 = vpop.f32.mrf.mxu0
    %v688 = vadd.f32 %v584, %v687
    %v689 = vpop.f32.mrf.mxu0
    %690 = vmatprep.mubr.bf16.mxu0 0
    %691 = vmatmul.mubr.bf16.gmra.mxu0 %v562
    %v692 = vpop.f32.mrf.mxu0
    %v693 = vadd.f32 %v584, %v692
    %v694 = vpop.f32.mrf.mxu0
    %v695 = vpop.f32.mrf.mxu0
    %v696 = vadd.f32 %v584, %v695
    %v697 = vpop.f32.mrf.mxu0
    %698 = vdwg.mxu0
    %v699 = vlaneseq
    %v700 = vand.u32 %v699, 127
    %vm701 = vcmp.lt.s32.totalorder %v700, 16
    %v702 = vsel %vm701, %v669, -1e+30
    %v703 = vsel %vm701, %v672, -1e+30
    %v704 = vsel %vm701, %v677, -1e+30
    %v705 = vsel %vm701, %v680, -1e+30
    %v706 = vsel %vm701, %v685, -1e+30
    %v707 = vsel %vm701, %v688, -1e+30
    %v708 = vsel %vm701, %v693, -1e+30
    %v709 = vsel %vm701, %v696, -1e+30
    %710 = vmax.xlane.f32.xlu0 %v702
    %v711 = vpop.xlane.xlu0 %710
    %712 = vmax.xlane.f32.xlu0 %v703
    %v713 = vpop.xlane.xlu0 %712
    %714 = vmax.xlane.f32.xlu0 %v704
    %v715 = vpop.xlane.xlu0 %714
    %716 = vmax.xlane.f32.xlu0 %v705
    %v717 = vpop.xlane.xlu0 %716
    %718 = vmax.xlane.f32.xlu0 %v706
    %v719 = vpop.xlane.xlu0 %718
    %720 = vmax.xlane.f32.xlu0 %v707
    %v721 = vpop.xlane.xlu0 %720
    %722 = vmax.xlane.f32.xlu0 %v708
    %v723 = vpop.xlane.xlu0 %722
    %724 = vmax.xlane.f32.xlu0 %v709
    %v725 = vpop.xlane.xlu0 %724
    %v726 = vsub.f32 %v702, %v711
    %v727 = vsub.f32 %v703, %v713
    %v728 = vsub.f32 %v704, %v715
    %v729 = vsub.f32 %v705, %v717
    %v730 = vsub.f32 %v706, %v719
    %v731 = vsub.f32 %v707, %v721
    %v732 = vsub.f32 %v708, %v723
    %v733 = vsub.f32 %v709, %v725
    %v734 = vmul.f32 %v726, 1.442695
    %v735 = vpow.pop %v734
    %v736 = vmul.f32 %v727, 1.442695
    %v737 = vpow.pop %v736
    %v738 = vmul.f32 %v728, 1.442695
    %v739 = vpow.pop %v738
    %v740 = vmul.f32 %v729, 1.442695
    %v741 = vpow.pop %v740
    %v742 = vmul.f32 %v730, 1.442695
    %v743 = vpow.pop %v742
    %v744 = vmul.f32 %v731, 1.442695
    %v745 = vpow.pop %v744
    %v746 = vmul.f32 %v732, 1.442695
    %v747 = vpow.pop %v746
    %v748 = vmul.f32 %v733, 1.442695
    %v749 = vpow.pop %v748
    %750 = vadd.xlane.f32.xlu0 %v735
    %v751 = vpop.xlane.xlu0 %750
    %752 = vadd.xlane.f32.xlu0 %v737
    %v753 = vpop.xlane.xlu0 %752
    %754 = vadd.xlane.f32.xlu0 %v739
    %v755 = vpop.xlane.xlu0 %754
    %756 = vadd.xlane.f32.xlu0 %v741
    %v757 = vpop.xlane.xlu0 %756
    %758 = vadd.xlane.f32.xlu0 %v743
    %v759 = vpop.xlane.xlu0 %758
    %760 = vadd.xlane.f32.xlu0 %v745
    %v761 = vpop.xlane.xlu0 %760
    %762 = vadd.xlane.f32.xlu0 %v747
    %v763 = vpop.xlane.xlu0 %762
    %764 = vadd.xlane.f32.xlu0 %v749
    %v765 = vpop.xlane.xlu0 %764
    %v766 = vrcp.pop %v751
    %v767 = vrcp.pop %v753
    %v768 = vrcp.pop %v755
    %v769 = vrcp.pop %v757
    %v770 = vrcp.pop %v759
    %v771 = vrcp.pop %v761
    %v772 = vrcp.pop %v763
    %v773 = vrcp.pop %v765
    %v774 = vmul.f32 %v735, %v766
    %v775 = vmul.f32 %v737, %v767
    %v776 = vmul.f32 %v739, %v768
    %v777 = vmul.f32 %v741, %v769
    %v778 = vmul.f32 %v743, %v770
    %v779 = vmul.f32 %v745, %v771
    %v780 = vmul.f32 %v747, %v772
    %v781 = vmul.f32 %v749, %v773
    %v782 = vmul.f32 %v529, %v774
    %v783 = vmul.f32 %v532, %v775
    %v784 = vmul.f32 %v537, %v776
    %v785 = vmul.f32 %v540, %v777
    %v786 = vmul.f32 %v545, %v778
    %v787 = vmul.f32 %v548, %v779
    %v788 = vmul.f32 %v553, %v780
    %v789 = vmul.f32 %v556, %v781
    %v790 = vadd.f32 %v782, %v89
    %v791 = vadd.f32 %v783, %v90
    %v792 = vadd.f32 %v784, %v91
    %v793 = vadd.f32 %v785, %v92
    %v794 = vadd.f32 %v786, %v93
    %v795 = vadd.f32 %v787, %v94
    %v796 = vadd.f32 %v788, %v95
    %v797 = vadd.f32 %v789, %v96
    %798 = vst [vmem:[#allocation10] sm:$0xff] %v790
    %799 = vst [vmem:[#allocation10 + $0x8] sm:$0xff] %v791
    %800 = vst [vmem:[#allocation10 + $0x10] sm:$0xff] %v792
    %801 = vst [vmem:[#allocation10 + $0x18] sm:$0xff] %v793
    %802 = vst [vmem:[#allocation10 + $0x20] sm:$0xff] %v794
    %803 = vst [vmem:[#allocation10 + $0x28] sm:$0xff] %v795
    %804 = vst [vmem:[#allocation10 + $0x30] sm:$0xff] %v796
    %805 = vst [vmem:[#allocation10 + $0x38] sm:$0xff] %v797
    // Predicated region
    $region54: #{tpu_custom_call.1} parent=1 // pred_check
      _
    $region55: #{tpu_custom_call.1} parent=1 // pred_check_branch
      %807 = sbr.rel (0) target = $region57
    $region56: #{tpu_custom_call.1} parent=1 // pred_region
      %s809 = ssub.s32 1024, 1024
      %810 = vsyncadd [#allocation4], %s809
      %s811 = sshll.u32 [#allocation10], 4
      %s812 = int_to_ptr.vmem [resolvable:$true] %s811
      %817 = dma.vmem_to_hbm [thread:$0]  %s812, 1024, %s9, [#allocation4], 128, 128, 8
    $region57: #{tpu_custom_call.1} parent=1 // pred_fallthru
      _
    // Predicated region
    $region58: #{tpu_custom_call.1} parent=1 // pred_check
      _
    $region59: #{tpu_custom_call.1} parent=1 // pred_check_branch
      %819 = sbr.rel (0) target = $region61
    $region60: #{tpu_custom_call.1} parent=1 // pred_region
      %820 = dma.done [#allocation4], 1024
    $region61: #{tpu_custom_call.1} parent=1 // pred_fallthru
      _
    %821 = vsyncpa [#allocation3], 1
    %822 = vsyncpa [#allocation6], 1
    %823 = vsyncpa [#allocation9], 1
    %824 = vsyncpa [#allocation4], 1

</llo_original>
